<compile_context>
chip_gen: v7x
topology: tpu7x:2x2x1
jax: 0.10.0
libtpu: 0.0.40
codegen_flags: <defaults>
</compile_context>

<pallas_src>
import math
import functools

import jax
import jax.numpy as jnp
from jax.experimental import pallas as pl
from jax.experimental.pallas import tpu as pltpu


_JITTER = 1e-6
_VMEM_LIMIT = 32 * 1024 * 1024  # safe on v5e (128 MiB phys), v6e, v7x (64 MiB phys)


def _round_up(n, m):
    return ((n + m - 1) // m) * m


def _tile_pad(n, base, max_tile):
    """Pick a tile (multiple of `base`, <= max_tile) and the padded extent it divides."""
    nb = _round_up(max(int(n), 1), base)
    tile = min(nb, max_tile)
    return tile, _round_up(nb, tile)


# ----------------------------------------------------------------------------
# Pallas kernel 1: RBF covariance
#   K[i, j] = var * exp(-||x1s_i - x2s_j||^2), x*s = x / (ls * sqrt(2))
#   (the 1/(ls*sqrt(2)) scaling and squared norms are precomputed in the
#    wrapper, so the kernel is a single MXU matmul + VALU adds + EUP exp.)
# ----------------------------------------------------------------------------
def _rbf_cov_kernel(x1_ref, x2t_ref, sq1_ref, sq2_ref, var_ref, k_ref):
    # x1: (tm, D), x2t: (D, tn) already transposed -> no XLU relayout per tile
    cross = jnp.dot(x1_ref[...], x2t_ref[...], preferred_element_type=jnp.float32)
    r2 = jnp.maximum(sq1_ref[...] + sq2_ref[...] - 2.0 * cross, 0.0)
    k_ref[...] = var_ref[0] * jnp.exp(-r2)


def rbf_cov_pallas(x1, x2, lengthscale, variance, *, row_tile=256, col_tile=512):
    """K(x1, x2) with an RBF kernel.  Returns (n1, n2) f32."""
    n1, d = x1.shape
    n2, _ = x2.shape

    inv_ls = (1.0 / (jnp.asarray(lengthscale, jnp.float32) * jnp.sqrt(2.0))).reshape(1, d)
    x1s = x1.astype(jnp.float32) * inv_ls
    x2s = x2.astype(jnp.float32) * inv_ls

    tm, n1p = _tile_pad(n1, 8, row_tile)      # sublane axis
    tn, n2p = _tile_pad(n2, 128, col_tile)    # lane axis -> lane-dense stores

    x1p = jnp.zeros((n1p, d), jnp.float32).at[:n1].set(x1s)
    x2tp = jnp.zeros((d, n2p), jnp.float32).at[:, :n2].set(x2s.T)
    sq1 = jnp.sum(x1p * x1p, axis=1, keepdims=True)    # (n1p, 1)
    sq2 = jnp.sum(x2tp * x2tp, axis=0, keepdims=True)  # (1, n2p)
    var = jnp.asarray(variance, jnp.float32).reshape(1)  # flat 1-D SMEM scalar

    grid = (n1p // tm, n2p // tn)
    cost = pl.CostEstimate(
        flops=2 * n1p * n2p * d + 4 * n1p * n2p,
        transcendentals=n1p * n2p,
        bytes_accessed=4 * (n1p * d + d * n2p + n1p + n2p + n1p * n2p),
    )

    k = pl.pallas_call(
        _rbf_cov_kernel,
        out_shape=jax.ShapeDtypeStruct((n1p, n2p), jnp.float32),
        grid=grid,
        in_specs=[
            pl.BlockSpec((tm, d), lambda i, j: (i, 0)),
            pl.BlockSpec((d, tn), lambda i, j: (0, j)),
            pl.BlockSpec((tm, 1), lambda i, j: (i, 0)),
            pl.BlockSpec((1, tn), lambda i, j: (0, j)),
            pl.BlockSpec(memory_space=pltpu.MemorySpace.SMEM),
        ],
        out_specs=pl.BlockSpec((tm, tn), lambda i, j: (i, j)),
        compiler_params=pltpu.CompilerParams(
            dimension_semantics=("parallel", "parallel"),  # v7x: shard tiles on 2 TCs
            vmem_limit_bytes=_VMEM_LIMIT,
        ),
        cost_estimate=cost,
    )(x1p, x2tp, sq1, sq2, var)
    return k[:n1, :n2]


# ----------------------------------------------------------------------------
# Pallas kernel 2: GP predictive combine (pyro GPRegression.forward, noiseless=False)
#   loc[m] = sum_n Kfs[n, m] * alpha[n]          (alpha = Kff^-1 (y - mean))
#   qf[m]  = sum_n W[n, m]^2,   W = L^{-1} Kfs   (qf >= 0 by construction)
#   var[m] = max(kernel_variance - qf[m], 0) + noise
# Grid: (M tiles parallel, N tiles arbitrary/reduction); reductions run on the
# MXU via (1,N)x(N,M) contractions; outputs accumulate in the resident block.
# ----------------------------------------------------------------------------
def _gp_predict_kernel(kfs_ref, alpha_ref, w_ref, scal_ref, loc_ref, var_ref):
    k = pl.program_id(1)

    @pl.when(k == 0)
    def _():
        loc_ref[...] = jnp.zeros_like(loc_ref)
        var_ref[...] = jnp.zeros_like(var_ref)

    kfs = kfs_ref[...]                                   # (tn, tm)
    w = w_ref[...]                                       # (tn, tm)
    ones = jnp.ones((1, kfs.shape[0]), jnp.float32)
    loc_ref[...] += jnp.dot(alpha_ref[...], kfs, preferred_element_type=jnp.float32)
    var_ref[...] += jnp.dot(ones, w * w, preferred_element_type=jnp.float32)

    @pl.when(k == pl.num_programs(1) - 1)
    def _():
        variance = scal_ref[0]
        noise = scal_ref[1]
        var_ref[...] = jnp.maximum(variance - var_ref[...], 0.0) + noise


def gp_predict_pallas(kfs, alpha, w, variance, noise, *, m_tile=512, n_tile=512):
    n, m = kfs.shape
    tm, mp = _tile_pad(m, 128, m_tile)   # lane axis of outputs -> lane-dense
    tn, npd = _tile_pad(n, 8, n_tile)    # reduction axis

    kfs_p = jnp.zeros((npd, mp), jnp.float32).at[:n, :m].set(kfs.astype(jnp.float32))
    w_p = jnp.zeros((npd, mp), jnp.float32).at[:n, :m].set(w.astype(jnp.float32))
    alpha_p = jnp.zeros((1, npd), jnp.float32).at[0, :n].set(alpha.astype(jnp.float32))
    scal = jnp.stack(
        [jnp.asarray(variance, jnp.float32), jnp.asarray(noise, jnp.float32)]
    )

    grid = (mp // tm, npd // tn)
    cost = pl.CostEstimate(
        flops=5 * npd * mp,
        transcendentals=0,
        bytes_accessed=4 * (2 * npd * mp + npd + 2 * mp),
    )

    loc, var = pl.pallas_call(
        _gp_predict_kernel,
        out_shape=(
            jax.ShapeDtypeStruct((1, mp), jnp.float32),
            jax.ShapeDtypeStruct((1, mp), jnp.float32),
        ),
        grid=grid,
        in_specs=[
            pl.BlockSpec((tn, tm), lambda i, k: (k, i)),
            pl.BlockSpec((1, tn), lambda i, k: (0, k)),
            pl.BlockSpec((tn, tm), lambda i, k: (k, i)),
            pl.BlockSpec(memory_space=pltpu.MemorySpace.SMEM),
        ],
        out_specs=(
            pl.BlockSpec((1, tm), lambda i, k: (0, i)),
            pl.BlockSpec((1, tm), lambda i, k: (0, i)),
        ),
        compiler_params=pltpu.CompilerParams(
            dimension_semantics=("parallel", "arbitrary"),
            vmem_limit_bytes=_VMEM_LIMIT,
        ),
        cost_estimate=cost,
    )(kfs_p, alpha_p, w_p, scal)
    return loc[0, :m], var[0, :m]


# ----------------------------------------------------------------------------
# Plain-JAX pieces: differentiable RBF + NLL for the adaptation loop.
# ----------------------------------------------------------------------------
def _rbf_cov_jax(x1, x2, ls, var):
    x1s = x1 / ls
    x2s = x2 / ls
    r2 = (
        jnp.sum(x1s * x1s, -1, keepdims=True)
        + jnp.sum(x2s * x2s, -1, keepdims=True).T
        - 2.0 * x1s @ x2s.T
    )
    return var * jnp.exp(-0.5 * jnp.maximum(r2, 0.0))


def _gp_nll(log_ls, log_var, x, y, noise):
    """Negative log marginal likelihood == pyro Trace_ELBO loss for GPRegression."""
    n = x.shape[0]
    ls = jnp.exp(log_ls)
    var = jnp.exp(log_var)
    kff = _rbf_cov_jax(x, x, ls, var) + (noise + _JITTER) * jnp.eye(n, dtype=jnp.float32)
    chol = jnp.linalg.cholesky(kff)
    alpha = jax.scipy.linalg.cho_solve((chol, True), y)
    logdet = 2.0 * jnp.sum(jnp.log(jnp.diag(chol)))
    return 0.5 * (jnp.dot(y, alpha) + logdet + n * math.log(2.0 * math.pi))


# ----------------------------------------------------------------------------
# DMEGP.forward equivalent
# ----------------------------------------------------------------------------
@functools.partial(jax.jit, static_argnames=("n_adapt",))
def dmegp_forward(params, X_sup, Y_sup, X_que, lr, n_adapt):
    """Return (y_loc, y_var, loss) = p(Y_que | X_sup, Y_sup, X_que) after
    n_adapt Adam steps on the (cloned) kernel hyperparameters."""
    X_sup = X_sup.astype(jnp.float32)
    Y_sup = Y_sup.astype(jnp.float32)
    X_que = X_que.astype(jnp.float32)
    noise = params["noise"]

    # --- adaptation (torch.optim.Adam on get_kernel_params(gp_clone)) --------
    # TODO(synk): gradients flow through a plain-JAX NLL (the Pallas kernels
    # here have no VJP); only the forward prediction hot path runs in Pallas.
    log_ls = jnp.log(params["lengthscale"])
    log_var = jnp.log(params["variance"])
    m = {"ls": jnp.zeros_like(log_ls), "var": jnp.zeros_like(log_var)}
    v = {"ls": jnp.zeros_like(log_ls), "var": jnp.zeros_like(log_var)}
    b1, b2, eps = 0.9, 0.999, 1e-8

    grad_fn = jax.value_and_grad(_gp_nll, argnums=(0, 1))
    loss = jnp.float32(0.0)
    for t in range(1, n_adapt + 1):
        loss, (g_ls, g_var) = grad_fn(log_ls, log_var, X_sup, Y_sup, noise)
        m["ls"] = b1 * m["ls"] + (1 - b1) * g_ls
        m["var"] = b1 * m["var"] + (1 - b1) * g_var
        v["ls"] = b2 * v["ls"] + (1 - b2) * g_ls**2
        v["var"] = b2 * v["var"] + (1 - b2) * g_var**2
        bc1, bc2 = 1 - b1**t, 1 - b2**t
        log_ls = log_ls - lr * (m["ls"] / bc1) / (jnp.sqrt(v["ls"] / bc2) + eps)
        log_var = log_var - lr * (m["var"] / bc1) / (jnp.sqrt(v["var"] / bc2) + eps)

    ls = jnp.exp(log_ls)
    var = jnp.exp(log_var)

    # --- prediction: gp_clone(X_que, noiseless=False) -------------------------
    n_sup = X_sup.shape[0]
    # Fused covariance: one pallas_call builds [Kff | Kfs] sharing the X_sup rows.
    X_all = jnp.concatenate([X_sup, X_que], axis=0)
    k_all = rbf_cov_pallas(X_sup, X_all, ls, var)            # (N, N+M) Pallas
    kff = k_all[:, :n_sup] + (noise + _JITTER) * jnp.eye(n_sup, dtype=jnp.float32)
    kfs = k_all[:, n_sup:]                                   # (N, M)

    # TODO(synk): dense Cholesky / triangular solves have no clean Pallas
    # equivalent at these sizes; done with jax.numpy / jax.scipy.
    chol = jnp.linalg.cholesky(kff)
    alpha = jax.scipy.linalg.cho_solve((chol, True), Y_sup)            # Kff^-1 y
    w = jax.scipy.linalg.solve_triangular(chol, kfs, lower=True)       # L^-1 Kfs

    # TODO(synk): for many tasks, vmap dmegp_forward over a task batch (Pallas
    # batches via an extra grid dim) to amortize per-call launch/DMA overhead.
    y_loc, y_var = gp_predict_pallas(kfs, alpha, w, var, noise)        # Pallas
    return y_loc, y_var, loss


def init_dmegp_params(input_dim):
    """Deterministic init matching DMEGP.__init__ with embed_fn=None:
    RBF(input_dim, lengthscale=ones) + pyro GPRegression defaults."""
    return {
        "lengthscale": jnp.ones((input_dim,), jnp.float32),
        "variance": jnp.float32(1.0),
        "noise": jnp.float32(1.0),
    }


if __name__ == "__main__":
    input_dim = 4
    n_sup, n_que = 8, 16

    key = jax.random.PRNGKey(0)
    k1, k2, k3 = jax.random.split(key, 3)
    X_sup = jax.random.normal(k1, (n_sup, input_dim), jnp.float32)
    Y_sup = jax.random.normal(k2, (n_sup,), jnp.float32)
    X_que = jax.random.normal(k3, (n_que, input_dim), jnp.float32)

    params = init_dmegp_params(input_dim)
    y_loc, y_var, loss = dmegp_forward(
        params, X_sup, Y_sup, X_que, lr=jnp.float32(0.01), n_adapt=5
    )
    jax.block_until_ready((y_loc, y_var, loss))

    assert y_loc.shape == (n_que,) and y_var.shape == (n_que,)
    assert bool(jnp.all(jnp.isfinite(y_loc))) and bool(jnp.all(y_var > 0))
    assert bool(jnp.isfinite(loss))
    print("KERNEL_OK")
</pallas_src>

<mosaic_0001>
module attributes {stable_mosaic.version = 11 : i64} {
  func.func @_gp_predict_kernel(%arg0: i32, %arg1: i32, %arg2: memref<8x128xf32, #tpu.memory_space<vmem>>, %arg3: memref<1x8xf32, #tpu.memory_space<vmem>>, %arg4: memref<8x128xf32, #tpu.memory_space<vmem>>, %arg5: memref<2xf32, #tpu.memory_space<smem>>, %arg6: memref<1x128xf32, #tpu.memory_space<vmem>>, %arg7: memref<1x128xf32, #tpu.memory_space<vmem>>) attributes {dimension_semantics = [#tpu.dimension_semantics<parallel>, #tpu.dimension_semantics<arbitrary>], iteration_bounds = array<i64: 1, 1>, scalar_prefetch = 0 : i64, scratch_operands = 0 : i64, tpu.core_type = #tpu.core_type<tc>, window_params = [{transform_indices = @transform_0, window_bounds = array<i64: 8, 128>}, {transform_indices = @transform_1, window_bounds = array<i64: 1, 8>}, {transform_indices = @transform_2, window_bounds = array<i64: 8, 128>}, {transform_indices = @transform_3, window_bounds = array<i64: 2>}, {transform_indices = @transform_4, window_bounds = array<i64: 1, 128>}, {transform_indices = @transform_5, window_bounds = array<i64: 1, 128>}]} {
    %c0_i32 = arith.constant 0 : i32
    %0 = arith.cmpi eq, %arg1, %c0_i32 : i32
    %1 = arith.extui %0 : i1 to i32
    %c0_i32_0 = arith.constant 0 : i32
    %2 = arith.cmpi ne, %1, %c0_i32_0 : i32
    scf.if %2 {
      %cst_18 = arith.constant 0.000000e+00 : f32
      %19 = vector.broadcast %cst_18 : f32 to vector<1x128xf32>
      %c0_19 = arith.constant 0 : index
      %c0_20 = arith.constant 0 : index
      %20 = vector.load %arg6[%c0_19, %c0_20] : memref<1x128xf32, #tpu.memory_space<vmem>>, vector<1x128xf32>
      tpu.vector_store %arg6[%c0_19, %c0_20], %19 {strides = array<i32>} : memref<1x128xf32, #tpu.memory_space<vmem>>, vector<1x128xf32>,
      %cst_21 = arith.constant 0.000000e+00 : f32
      %21 = vector.broadcast %cst_21 : f32 to vector<1x128xf32>
      %c0_22 = arith.constant 0 : index
      %c0_23 = arith.constant 0 : index
      %22 = vector.load %arg7[%c0_22, %c0_23] : memref<1x128xf32, #tpu.memory_space<vmem>>, vector<1x128xf32>
      tpu.vector_store %arg7[%c0_22, %c0_23], %21 {strides = array<i32>} : memref<1x128xf32, #tpu.memory_space<vmem>>, vector<1x128xf32>,
    } else {
    }
    %c0 = arith.constant 0 : index
    %c0_1 = arith.constant 0 : index
    %3 = vector.load %arg2[%c0, %c0_1] : memref<8x128xf32, #tpu.memory_space<vmem>>, vector<8x128xf32>
    %c0_2 = arith.constant 0 : index
    %c0_3 = arith.constant 0 : index
    %4 = vector.load %arg4[%c0_2, %c0_3] : memref<8x128xf32, #tpu.memory_space<vmem>>, vector<8x128xf32>
    %cst = arith.constant 1.000000e+00 : f32
    %5 = vector.broadcast %cst : f32 to vector<1x8xf32>
    %c0_4 = arith.constant 0 : index
    %c0_5 = arith.constant 0 : index
    %6 = vector.load %arg6[%c0_4, %c0_5] : memref<1x128xf32, #tpu.memory_space<vmem>>, vector<1x128xf32>
    %c0_6 = arith.constant 0 : index
    %c0_7 = arith.constant 0 : index
    %7 = vector.load %arg3[%c0_6, %c0_7] : memref<1x8xf32, #tpu.memory_space<vmem>>, vector<1x8xf32>
    %cst_8 = arith.constant dense<0.000000e+00> : vector<1x128xf32>
    %8 = tpu.matmul %7, %3, %cst_8 {dimension_numbers = #tpu.dot_dimension_numbers<[1], [0], [0], [1], [0, 0, 1, 1], [], []>} : vector<1x8xf32>, vector<8x128xf32>, vector<1x128xf32> -> vector<1x128xf32>
    %9 = arith.addf %6, %8 : vector<1x128xf32>
    %c0_9 = arith.constant 0 : index
    %c0_10 = arith.constant 0 : index
    %10 = vector.load %arg6[%c0_9, %c0_10] : memref<1x128xf32, #tpu.memory_space<vmem>>, vector<1x128xf32>
    tpu.vector_store %arg6[%c0_9, %c0_10], %9 {strides = array<i32>} : memref<1x128xf32, #tpu.memory_space<vmem>>, vector<1x128xf32>,
    %c0_11 = arith.constant 0 : index
    %c0_12 = arith.constant 0 : index
    %11 = vector.load %arg7[%c0_11, %c0_12] : memref<1x128xf32, #tpu.memory_space<vmem>>, vector<1x128xf32>
    %12 = arith.mulf %4, %4 : vector<8x128xf32>
    %cst_13 = arith.constant dense<0.000000e+00> : vector<1x128xf32>
    %13 = tpu.matmul %5, %12, %cst_13 {dimension_numbers = #tpu.dot_dimension_numbers<[1], [0], [0], [1], [0, 0, 1, 1], [], []>} : vector<1x8xf32>, vector<8x128xf32>, vector<1x128xf32> -> vector<1x128xf32>
    %14 = arith.addf %11, %13 : vector<1x128xf32>
    %c0_14 = arith.constant 0 : index
    %c0_15 = arith.constant 0 : index
    %15 = vector.load %arg7[%c0_14, %c0_15] : memref<1x128xf32, #tpu.memory_space<vmem>>, vector<1x128xf32>
    tpu.vector_store %arg7[%c0_14, %c0_15], %14 {strides = array<i32>} : memref<1x128xf32, #tpu.memory_space<vmem>>, vector<1x128xf32>,
    %c0_i32_16 = arith.constant 0 : i32
    %16 = arith.cmpi eq, %arg1, %c0_i32_16 : i32
    %17 = arith.extui %16 : i1 to i32
    %c0_i32_17 = arith.constant 0 : i32
    %18 = arith.cmpi ne, %17, %c0_i32_17 : i32
    scf.if %18 {
      %c0_18 = arith.constant 0 : index
      %19 = memref.load %arg5[%c0_18] : memref<2xf32, #tpu.memory_space<smem>>
      %c1 = arith.constant 1 : index
      %20 = memref.load %arg5[%c1] : memref<2xf32, #tpu.memory_space<smem>>
      %c0_19 = arith.constant 0 : index
      %c0_20 = arith.constant 0 : index
      %21 = vector.load %arg7[%c0_19, %c0_20] : memref<1x128xf32, #tpu.memory_space<vmem>>, vector<1x128xf32>
      %22 = vector.broadcast %19 : f32 to vector<1x128xf32>
      %23 = arith.subf %22, %21 : vector<1x128xf32>
      %cst_21 = arith.constant 0.000000e+00 : f32
      %24 = vector.broadcast %cst_21 : f32 to vector<1x128xf32>
      %25 = arith.maximumf %23, %24 : vector<1x128xf32>
      %26 = vector.broadcast %20 : f32 to vector<1x128xf32>
      %27 = arith.addf %25, %26 : vector<1x128xf32>
      %c0_22 = arith.constant 0 : index
      %c0_23 = arith.constant 0 : index
      %28 = vector.load %arg7[%c0_22, %c0_23] : memref<1x128xf32, #tpu.memory_space<vmem>>, vector<1x128xf32>
      tpu.vector_store %arg7[%c0_22, %c0_23], %27 {strides = array<i32>} : memref<1x128xf32, #tpu.memory_space<vmem>>, vector<1x128xf32>,
    } else {
    }
    return
  }
  func.func @transform_0(%arg0: i32, %arg1: i32) -> (i32, i32) {
    %c0_i32 = arith.constant 0 : i32
    return %arg1, %arg0 : i32, i32
  }
  func.func @transform_1(%arg0: i32, %arg1: i32) -> (i32, i32) {
    %c0_i32 = arith.constant 0 : i32
    %c0_i32_0 = arith.constant 0 : i32
    return %c0_i32, %arg1 : i32, i32
  }
  func.func @transform_2(%arg0: i32, %arg1: i32) -> (i32, i32) {
    %c0_i32 = arith.constant 0 : i32
    return %arg1, %arg0 : i32, i32
  }
  func.func @transform_3(%arg0: i32, %arg1: i32) -> i32 {
    %c0_i32 = arith.constant 0 : i32
    %c0_i32_0 = arith.constant 0 : i32
    return %c0_i32 : i32
  }
  func.func @transform_4(%arg0: i32, %arg1: i32) -> (i32, i32) {
    %c0_i32 = arith.constant 0 : i32
    %c0_i32_0 = arith.constant 0 : i32
    return %c0_i32, %arg0 : i32, i32
  }
  func.func @transform_5(%arg0: i32, %arg1: i32) -> (i32, i32) {
    %c0_i32 = arith.constant 0 : i32
    %c0_i32_0 = arith.constant 0 : i32
    return %c0_i32, %arg0 : i32, i32
  }
}

module attributes {stable_mosaic.version = 11 : i64} {
  func.func @_rbf_cov_kernel(%arg0: i32, %arg1: i32, %arg2: memref<8x4xf32, #tpu.memory_space<vmem>>, %arg3: memref<4x128xf32, #tpu.memory_space<vmem>>, %arg4: memref<8x1xf32, #tpu.memory_space<vmem>>, %arg5: memref<1x128xf32, #tpu.memory_space<vmem>>, %arg6: memref<1xf32, #tpu.memory_space<smem>>, %arg7: memref<8x128xf32, #tpu.memory_space<vmem>>) attributes {dimension_semantics = [#tpu.dimension_semantics<parallel>, #tpu.dimension_semantics<parallel>], iteration_bounds = array<i64: 1, 1>, scalar_prefetch = 0 : i64, scratch_operands = 0 : i64, tpu.core_type = #tpu.core_type<tc>, window_params = [{transform_indices = @transform_0, window_bounds = array<i64: 8, 4>}, {transform_indices = @transform_1, window_bounds = array<i64: 4, 128>}, {transform_indices = @transform_2, window_bounds = array<i64: 8, 1>}, {transform_indices = @transform_3, window_bounds = array<i64: 1, 128>}, {transform_indices = @transform_4, window_bounds = array<i64: 1>}, {transform_indices = @transform_5, window_bounds = array<i64: 8, 128>}]} {
    %c0 = arith.constant 0 : index
    %c0_0 = arith.constant 0 : index
    %0 = vector.load %arg2[%c0, %c0_0] : memref<8x4xf32, #tpu.memory_space<vmem>>, vector<8x4xf32>
    %c0_1 = arith.constant 0 : index
    %c0_2 = arith.constant 0 : index
    %1 = vector.load %arg3[%c0_1, %c0_2] : memref<4x128xf32, #tpu.memory_space<vmem>>, vector<4x128xf32>
    %cst = arith.constant dense<0.000000e+00> : vector<8x128xf32>
    %2 = tpu.matmul %0, %1, %cst {dimension_numbers = #tpu.dot_dimension_numbers<[1], [0], [0], [1], [0, 0, 1, 1], [], []>} : vector<8x4xf32>, vector<4x128xf32>, vector<8x128xf32> -> vector<8x128xf32>
    %c0_3 = arith.constant 0 : index
    %c0_4 = arith.constant 0 : index
    %3 = vector.load %arg4[%c0_3, %c0_4] : memref<8x1xf32, #tpu.memory_space<vmem>>, vector<8x1xf32>
    %c0_5 = arith.constant 0 : index
    %c0_6 = arith.constant 0 : index
    %4 = vector.load %arg5[%c0_5, %c0_6] : memref<1x128xf32, #tpu.memory_space<vmem>>, vector<1x128xf32>
    %5 = vector.broadcast %3 : vector<8x1xf32> to vector<8x128xf32>
    %6 = vector.broadcast %4 : vector<1x128xf32> to vector<8x128xf32>
    %7 = arith.addf %5, %6 : vector<8x128xf32>
    %cst_7 = arith.constant 2.000000e+00 : f32
    %8 = vector.broadcast %cst_7 : f32 to vector<8x128xf32>
    %9 = arith.mulf %8, %2 : vector<8x128xf32>
    %10 = arith.subf %7, %9 : vector<8x128xf32>
    %cst_8 = arith.constant 0.000000e+00 : f32
    %11 = vector.broadcast %cst_8 : f32 to vector<8x128xf32>
    %12 = arith.maximumf %10, %11 : vector<8x128xf32>
    %c0_9 = arith.constant 0 : index
    %13 = memref.load %arg6[%c0_9] : memref<1xf32, #tpu.memory_space<smem>>
    %cst_10 = arith.constant 0.000000e+00 : f32
    %14 = vector.broadcast %cst_10 : f32 to vector<8x128xf32>
    %15 = arith.subf %14, %12 : vector<8x128xf32>
    %16 = math.exp %15 : vector<8x128xf32>
    %17 = vector.broadcast %13 : f32 to vector<8x128xf32>
    %18 = arith.mulf %17, %16 : vector<8x128xf32>
    %c0_11 = arith.constant 0 : index
    %c0_12 = arith.constant 0 : index
    %19 = vector.load %arg7[%c0_11, %c0_12] : memref<8x128xf32, #tpu.memory_space<vmem>>, vector<8x128xf32>
    tpu.vector_store %arg7[%c0_11, %c0_12], %18 {strides = array<i32>} : memref<8x128xf32, #tpu.memory_space<vmem>>, vector<8x128xf32>,
    return
  }
  func.func @transform_0(%arg0: i32, %arg1: i32) -> (i32, i32) {
    %c0_i32 = arith.constant 0 : i32
    %c0_i32_0 = arith.constant 0 : i32
    return %arg0, %c0_i32 : i32, i32
  }
  func.func @transform_1(%arg0: i32, %arg1: i32) -> (i32, i32) {
    %c0_i32 = arith.constant 0 : i32
    %c0_i32_0 = arith.constant 0 : i32
    return %c0_i32, %arg1 : i32, i32
  }
  func.func @transform_2(%arg0: i32, %arg1: i32) -> (i32, i32) {
    %c0_i32 = arith.constant 0 : i32
    %c0_i32_0 = arith.constant 0 : i32
    return %arg0, %c0_i32 : i32, i32
  }
  func.func @transform_3(%arg0: i32, %arg1: i32) -> (i32, i32) {
    %c0_i32 = arith.constant 0 : i32
    %c0_i32_0 = arith.constant 0 : i32
    return %c0_i32, %arg1 : i32, i32
  }
  func.func @transform_4(%arg0: i32, %arg1: i32) -> i32 {
    %c0_i32 = arith.constant 0 : i32
    %c0_i32_0 = arith.constant 0 : i32
    return %c0_i32 : i32
  }
  func.func @transform_5(%arg0: i32, %arg1: i32) -> (i32, i32) {
    %c0_i32 = arith.constant 0 : i32
    return %arg0, %arg1 : i32, i32
  }
}

</mosaic_0001>

<llo_original>
// kernel: custom-call.74
$region0: #{custom-call.74}
  %s0 = inlined_call_operand.vmem [shape: f32[8,8], index: 0, kind: input, shape index: {}]
  %s1 = inlined_call_operand.vmem [shape: f32[8,8], index: 1, kind: output, shape index: {}]
  $region1: #{custom-call.74} parent=0
    #allocation0 [shape = 'u8[4096]{0}', space=vmem, size = 0x1000, scoped, tag = 'operand span for operand 0']
    #allocation1 [shape = 'u8[4096]{0}', space=vmem, size = 0x1000, scoped, tag = 'operand span for operand 1']
    // Predicated region
    $region2: #{custom-call.74} parent=1 // pred_check
      _
    $region3: #{custom-call.74} parent=1 // pred_check_branch
      %3 = sbr.rel (0) target = $region5
    $region4: #{custom-call.74} parent=1 // pred_region
      // Predicated region
      $region6: #{custom-call.74} parent=4 // pred_check
        _
      $region7: #{custom-call.74} parent=4 // pred_check_branch
        %5 = sbr.rel (0) target = $region9
      $region8: #{custom-call.74} parent=4 // pred_region
        // Predicated region
        $region21: #{custom-call.74} parent=8 // pred_check
          _
        $region22: #{custom-call.74} parent=8 // pred_check_branch
          %20 = sbr.rel (0) target = $region24
        $region23: #{custom-call.74} parent=8 // pred_region
          loop: start=0, step=1, limit=1
          $region25: #{custom-call.74} parent=23 // loop_pre_header
            _
          $region26: #{custom-call.74} parent=23 // loop_header
            %s22 = sphi 0, %s26
            %p23 = scmp.ge.s32.totalorder %s22, 1
            %s27 = sphi %s0, %s0
            %s28 = sphi [#allocation0], [#allocation0]
          $region27: #{custom-call.74} parent=23 // loop_header_branch
            %25 = sbr.rel (%p23) target = $region31
          $region28: #{custom-call.74} parent=23 // loop_body
            %v29 = vld [vmem:[%s27] sm:$0xff]
            %30 = vst [vmem:[%s28] sm:$0xff] %v29
          $region29: #{custom-call.74} parent=23 // loop_footer
            %s26 = sadd.s32 1, %s22
          $region30: #{custom-call.74} parent=23 // loop_footer_branch
            %21 = sbr.rel target = $region26
          $region31: #{custom-call.74} parent=23 // loop_exit
            _
        $region24: #{custom-call.74} parent=8 // pred_fallthru
          _
        // Predicated region
        $region32: #{custom-call.74} parent=8 // pred_check
          _
        $region33: #{custom-call.74} parent=8 // pred_check_branch
          %32 = sbr.rel target = $region35
        $region34: #{custom-call.74} parent=8 // pred_region
          _
        $region35: #{custom-call.74} parent=8 // pred_fallthru
          _
      $region9: #{custom-call.74} parent=4 // pred_fallthru
        _
      // Predicated region
      $region10: #{custom-call.74} parent=4 // pred_check
        _
      $region11: #{custom-call.74} parent=4 // pred_check_branch
        %7 = sbr.rel target = $region13
      $region12: #{custom-call.74} parent=4 // pred_region
        loop: start=0, step=1, limit=1
        $region14: #{custom-call.74} parent=12 // loop_pre_header
          _
        $region15: #{custom-call.74} parent=12 // loop_header
          %s10 = sphi 0, %s14
          %p11 = scmp.ge.s32.totalorder %s10, 1
          %s15 = sphi %s0, %s0
          %s16 = sphi [#allocation0], [#allocation0]
        $region16: #{custom-call.74} parent=12 // loop_header_branch
          %13 = sbr.rel (%p11) target = $region20
        $region17: #{custom-call.74} parent=12 // loop_body
          %v17 = vld [vmem:[%s15] sm:$0xff]
          %18 = vst [vmem:[%s16] sm:$0xff] %v17
        $region18: #{custom-call.74} parent=12 // loop_footer
          %s14 = sadd.s32 1, %s10
        $region19: #{custom-call.74} parent=12 // loop_footer_branch
          %9 = sbr.rel target = $region15
        $region20: #{custom-call.74} parent=12 // loop_exit
          _
      $region13: #{custom-call.74} parent=4 // pred_fallthru
        _
    $region5: #{custom-call.74} parent=1 // pred_fallthru
      _
    %33 = vnop
    %34 = vst [vmem:[#allocation1] sm:$0xff] 0.0
    %vm35 = vcmask 7168
    %v36 = vld [vmem:[#allocation1] ss:$0 sm:$0xff]
    %v37 = vld [vmem:[#allocation0] ss:$0 sm:$0xff]
    %v38 = vmul.f32 %v36, %v36
    %39 = vadd.xlane.f32.xlu0 %v38
    %v40 = vpop.xlane.xlu0 %39
    %v41 = vsub.f32 %v37, %v40
    %v42 = vrsqrt.pop %v41
    %v43 = vld [vmem:[#allocation0] sm:$0xff]
    %v44 = vld [vmem:[#allocation1] sm:$0xff]
    %v45 = vmul.f32 %v44, %v36
    %46 = vadd.xlane.f32.xlu0 %v45
    %v47 = vpop.xlane.xlu0 %46
    %v48 = vsub.f32 %v43, %v47
    %v49 = vmul.f32 %v48, %v42
    %v50 = vsel %vm35, %v49, 0.0
    %v51 = vadd.f32 %v44, %v50
    %52 = vst [vmem:[#allocation1] sm:$0xff] %v51
    %vm53 = vcmask 15368
    %s54 = scalar_lea.vmem [#allocation1], 1
    %v55 = vld [vmem:[%s54] ss:$0 sm:$0xff]
    %s56 = scalar_lea.vmem [#allocation0], 1
    %v57 = vld [vmem:[%s56] ss:$0 sm:$0xff]
    %v58 = vmul.f32 %v55, %v55
    %59 = vadd.xlane.f32.xlu0 %v58
    %v60 = vpop.xlane.xlu0 %59
    %v61 = vsub.f32 %v57, %v60
    %v62 = vrsqrt.pop %v61
    %v63 = vld [vmem:[#allocation0] sm:$0xff]
    %v64 = vld [vmem:[#allocation1] sm:$0xff]
    %v65 = vmul.f32 %v64, %v55
    %66 = vadd.xlane.f32.xlu0 %v65
    %v67 = vpop.xlane.xlu0 %66
    %v68 = vsub.f32 %v63, %v67
    %v69 = vmul.f32 %v68, %v62
    %vm70 = vcmask 1047553
    %vm71 = vmand %vm53, %vm70
    %v72 = vsel %vm71, %v69, 0.0
    %v73 = vadd.f32 %v64, %v72
    %74 = vst [vmem:[#allocation1] sm:$0xff] %v73
    %vm75 = vcmask 23568
    %s76 = scalar_lea.vmem [#allocation1], 2
    %v77 = vld [vmem:[%s76] ss:$0 sm:$0xff]
    %s78 = scalar_lea.vmem [#allocation0], 2
    %v79 = vld [vmem:[%s78] ss:$0 sm:$0xff]
    %v80 = vmul.f32 %v77, %v77
    %81 = vadd.xlane.f32.xlu0 %v80
    %v82 = vpop.xlane.xlu0 %81
    %v83 = vsub.f32 %v79, %v82
    %v84 = vrsqrt.pop %v83
    %v85 = vld [vmem:[#allocation0] sm:$0xff]
    %v86 = vld [vmem:[#allocation1] sm:$0xff]
    %v87 = vmul.f32 %v86, %v77
    %88 = vadd.xlane.f32.xlu0 %v87
    %v89 = vpop.xlane.xlu0 %88
    %v90 = vsub.f32 %v85, %v89
    %v91 = vmul.f32 %v90, %v84
    %vm92 = vcmask 1047554
    %vm93 = vmand %vm75, %vm92
    %v94 = vsel %vm93, %v91, 0.0
    %v95 = vadd.f32 %v86, %v94
    %96 = vst [vmem:[#allocation1] sm:$0xff] %v95
    %vm97 = vcmask 31768
    %s98 = scalar_lea.vmem [#allocation1], 3
    %v99 = vld [vmem:[%s98] ss:$0 sm:$0xff]
    %s100 = scalar_lea.vmem [#allocation0], 3
    %v101 = vld [vmem:[%s100] ss:$0 sm:$0xff]
    %v102 = vmul.f32 %v99, %v99
    %103 = vadd.xlane.f32.xlu0 %v102
    %v104 = vpop.xlane.xlu0 %103
    %v105 = vsub.f32 %v101, %v104
    %v106 = vrsqrt.pop %v105
    %v107 = vld [vmem:[#allocation0] sm:$0xff]
    %v108 = vld [vmem:[#allocation1] sm:$0xff]
    %v109 = vmul.f32 %v108, %v99
    %110 = vadd.xlane.f32.xlu0 %v109
    %v111 = vpop.xlane.xlu0 %110
    %v112 = vsub.f32 %v107, %v111
    %v113 = vmul.f32 %v112, %v106
    %vm114 = vcmask 1047555
    %vm115 = vmand %vm97, %vm114
    %v116 = vsel %vm115, %v113, 0.0
    %v117 = vadd.f32 %v108, %v116
    %118 = vst [vmem:[#allocation1] sm:$0xff] %v117
    %vm119 = vcmask 39968
    %s120 = scalar_lea.vmem [#allocation1], 4
    %v121 = vld [vmem:[%s120] ss:$0 sm:$0xff]
    %s122 = scalar_lea.vmem [#allocation0], 4
    %v123 = vld [vmem:[%s122] ss:$0 sm:$0xff]
    %v124 = vmul.f32 %v121, %v121
    %125 = vadd.xlane.f32.xlu0 %v124
    %v126 = vpop.xlane.xlu0 %125
    %v127 = vsub.f32 %v123, %v126
    %v128 = vrsqrt.pop %v127
    %v129 = vld [vmem:[#allocation0] sm:$0xff]
    %v130 = vld [vmem:[#allocation1] sm:$0xff]
    %v131 = vmul.f32 %v130, %v121
    %132 = vadd.xlane.f32.xlu0 %v131
    %v133 = vpop.xlane.xlu0 %132
    %v134 = vsub.f32 %v129, %v133
    %v135 = vmul.f32 %v134, %v128
    %vm136 = vcmask 1047556
    %vm137 = vmand %vm119, %vm136
    %v138 = vsel %vm137, %v135, 0.0
    %v139 = vadd.f32 %v130, %v138
    %140 = vst [vmem:[#allocation1] sm:$0xff] %v139
    %vm141 = vcmask 48168
    %s142 = scalar_lea.vmem [#allocation1], 5
    %v143 = vld [vmem:[%s142] ss:$0 sm:$0xff]
    %s144 = scalar_lea.vmem [#allocation0], 5
    %v145 = vld [vmem:[%s144] ss:$0 sm:$0xff]
    %v146 = vmul.f32 %v143, %v143
    %147 = vadd.xlane.f32.xlu0 %v146
    %v148 = vpop.xlane.xlu0 %147
    %v149 = vsub.f32 %v145, %v148
    %v150 = vrsqrt.pop %v149
    %v151 = vld [vmem:[#allocation0] sm:$0xff]
    %v152 = vld [vmem:[#allocation1] sm:$0xff]
    %v153 = vmul.f32 %v152, %v143
    %154 = vadd.xlane.f32.xlu0 %v153
    %v155 = vpop.xlane.xlu0 %154
    %v156 = vsub.f32 %v151, %v155
    %v157 = vmul.f32 %v156, %v150
    %vm158 = vcmask 1047557
    %vm159 = vmand %vm141, %vm158
    %v160 = vsel %vm159, %v157, 0.0
    %v161 = vadd.f32 %v152, %v160
    %162 = vst [vmem:[#allocation1] sm:$0xff] %v161
    %vm163 = vcmask 56368
    %s164 = scalar_lea.vmem [#allocation1], 6
    %v165 = vld [vmem:[%s164] ss:$0 sm:$0xff]
    %s166 = scalar_lea.vmem [#allocation0], 6
    %v167 = vld [vmem:[%s166] ss:$0 sm:$0xff]
    %v168 = vmul.f32 %v165, %v165
    %169 = vadd.xlane.f32.xlu0 %v168
    %v170 = vpop.xlane.xlu0 %169
    %v171 = vsub.f32 %v167, %v170
    %v172 = vrsqrt.pop %v171
    %v173 = vld [vmem:[#allocation0] sm:$0xff]
    %v174 = vld [vmem:[#allocation1] sm:$0xff]
    %v175 = vmul.f32 %v174, %v165
    %176 = vadd.xlane.f32.xlu0 %v175
    %v177 = vpop.xlane.xlu0 %176
    %v178 = vsub.f32 %v173, %v177
    %v179 = vmul.f32 %v178, %v172
    %vm180 = vcmask 1047558
    %vm181 = vmand %vm163, %vm180
    %v182 = vsel %vm181, %v179, 0.0
    %v183 = vadd.f32 %v174, %v182
    %184 = vst [vmem:[#allocation1] sm:$0xff] %v183
    %vm185 = vcmask 64568
    %s186 = scalar_lea.vmem [#allocation1], 7
    %v187 = vld [vmem:[%s186] ss:$0 sm:$0xff]
    %s188 = scalar_lea.vmem [#allocation0], 7
    %v189 = vld [vmem:[%s188] ss:$0 sm:$0xff]
    %v190 = vmul.f32 %v187, %v187
    %191 = vadd.xlane.f32.xlu0 %v190
    %v192 = vpop.xlane.xlu0 %191
    %v193 = vsub.f32 %v189, %v192
    %v194 = vrsqrt.pop %v193
    %v195 = vld [vmem:[#allocation0] sm:$0xff]
    %v196 = vld [vmem:[#allocation1] sm:$0xff]
    %v197 = vmul.f32 %v196, %v187
    %198 = vadd.xlane.f32.xlu0 %v197
    %v199 = vpop.xlane.xlu0 %198
    %v200 = vsub.f32 %v195, %v199
    %v201 = vmul.f32 %v200, %v194
    %vm202 = vcmask 1047559
    %vm203 = vmand %vm185, %vm202
    %v204 = vsel %vm203, %v201, 0.0
    %v205 = vadd.f32 %v196, %v204
    %206 = vst [vmem:[#allocation1] sm:$0xff] %v205
    // Predicated region
    $region36: #{custom-call.74} parent=1 // pred_check
      _
    $region37: #{custom-call.74} parent=1 // pred_check_branch
      %208 = sbr.rel (0) target = $region39
    $region38: #{custom-call.74} parent=1 // pred_region
      // Predicated region
      $region40: #{custom-call.74} parent=38 // pred_check
        _
      $region41: #{custom-call.74} parent=38 // pred_check_branch
        %210 = sbr.rel (0) target = $region43
      $region42: #{custom-call.74} parent=38 // pred_region
        // Predicated region
        $region55: #{custom-call.74} parent=42 // pred_check
          _
        $region56: #{custom-call.74} parent=42 // pred_check_branch
          %225 = sbr.rel (0) target = $region58
        $region57: #{custom-call.74} parent=42 // pred_region
          loop: start=0, step=1, limit=1
          $region59: #{custom-call.74} parent=57 // loop_pre_header
            _
          $region60: #{custom-call.74} parent=57 // loop_header
            %s227 = sphi 0, %s231
            %p228 = scmp.ge.s32.totalorder %s227, 1
            %s232 = sphi [#allocation1], [#allocation1]
            %s233 = sphi %s1, %s1
          $region61: #{custom-call.74} parent=57 // loop_header_branch
            %230 = sbr.rel (%p228) target = $region65
          $region62: #{custom-call.74} parent=57 // loop_body
            %v234 = vld [vmem:[%s232] sm:$0xff]
            %235 = vst [vmem:[%s233] sm:$0xff] %v234
          $region63: #{custom-call.74} parent=57 // loop_footer
            %s231 = sadd.s32 1, %s227
          $region64: #{custom-call.74} parent=57 // loop_footer_branch
            %226 = sbr.rel target = $region60
          $region65: #{custom-call.74} parent=57 // loop_exit
            _
        $region58: #{custom-call.74} parent=42 // pred_fallthru
          _
        // Predicated region
        $region66: #{custom-call.74} parent=42 // pred_check
          _
        $region67: #{custom-call.74} parent=42 // pred_check_branch
          %237 = sbr.rel target = $region69
        $region68: #{custom-call.74} parent=42 // pred_region
          _
        $region69: #{custom-call.74} parent=42 // pred_fallthru
          _
      $region43: #{custom-call.74} parent=38 // pred_fallthru
        _
      // Predicated region
      $region44: #{custom-call.74} parent=38 // pred_check
        _
      $region45: #{custom-call.74} parent=38 // pred_check_branch
        %212 = sbr.rel target = $region47
      $region46: #{custom-call.74} parent=38 // pred_region
        loop: start=0, step=1, limit=1
        $region48: #{custom-call.74} parent=46 // loop_pre_header
          _
        $region49: #{custom-call.74} parent=46 // loop_header
          %s215 = sphi 0, %s219
          %p216 = scmp.ge.s32.totalorder %s215, 1
          %s220 = sphi [#allocation1], [#allocation1]
          %s221 = sphi %s1, %s1
        $region50: #{custom-call.74} parent=46 // loop_header_branch
          %218 = sbr.rel (%p216) target = $region54
        $region51: #{custom-call.74} parent=46 // loop_body
          %v222 = vld [vmem:[%s220] sm:$0xff]
          %223 = vst [vmem:[%s221] sm:$0xff] %v222
        $region52: #{custom-call.74} parent=46 // loop_footer
          %s219 = sadd.s32 1, %s215
        $region53: #{custom-call.74} parent=46 // loop_footer_branch
          %214 = sbr.rel target = $region49
        $region54: #{custom-call.74} parent=46 // loop_exit
          _
      $region47: #{custom-call.74} parent=38 // pred_fallthru
        _
    $region39: #{custom-call.74} parent=1 // pred_fallthru
      _
    %238 = vnop

// kernel: custom-call.77
$region0: #{custom-call.77}
  %s0 = inlined_call_operand.vmem [shape: f32[1,8,8], index: 0, kind: input, shape index: {}]
  %s1 = inlined_call_operand.vmem [shape: f32[1,8,8], index: 1, kind: output, shape index: {}]
  $region1: #{custom-call.77} parent=0
    #allocation0 [shape = 'u8[4096]{0}', space=vmem, size = 0x1000, scoped, tag = 'operand span for operand 0']
    #allocation1 [shape = 'u8[4096]{0}', space=vmem, size = 0x1000, scoped, tag = 'operand span for operand 1']
    #allocation2 [shape = 'f32[8,8]{1,0}', space=vmem, size = 0x1000, scoped, tag = 'rescaled input a']
    // Predicated region
    $region2: #{custom-call.77} parent=1 // pred_check
      _
    $region3: #{custom-call.77} parent=1 // pred_check_branch
      %3 = sbr.rel (0) target = $region5
    $region4: #{custom-call.77} parent=1 // pred_region
      // Predicated region
      $region6: #{custom-call.77} parent=4 // pred_check
        _
      $region7: #{custom-call.77} parent=4 // pred_check_branch
        %5 = sbr.rel (0) target = $region9
      $region8: #{custom-call.77} parent=4 // pred_region
        // Predicated region
        $region21: #{custom-call.77} parent=8 // pred_check
          _
        $region22: #{custom-call.77} parent=8 // pred_check_branch
          %20 = sbr.rel (0) target = $region24
        $region23: #{custom-call.77} parent=8 // pred_region
          loop: start=0, step=1, limit=1
          $region25: #{custom-call.77} parent=23 // loop_pre_header
            _
          $region26: #{custom-call.77} parent=23 // loop_header
            %s22 = sphi 0, %s26
            %p23 = scmp.ge.s32.totalorder %s22, 1
            %s27 = sphi %s0, %s0
            %s28 = sphi [#allocation0], [#allocation0]
          $region27: #{custom-call.77} parent=23 // loop_header_branch
            %25 = sbr.rel (%p23) target = $region31
          $region28: #{custom-call.77} parent=23 // loop_body
            %v29 = vld [vmem:[%s27] sm:$0xff]
            %30 = vst [vmem:[%s28] sm:$0xff] %v29
          $region29: #{custom-call.77} parent=23 // loop_footer
            %s26 = sadd.s32 1, %s22
          $region30: #{custom-call.77} parent=23 // loop_footer_branch
            %21 = sbr.rel target = $region26
          $region31: #{custom-call.77} parent=23 // loop_exit
            _
        $region24: #{custom-call.77} parent=8 // pred_fallthru
          _
        // Predicated region
        $region32: #{custom-call.77} parent=8 // pred_check
          _
        $region33: #{custom-call.77} parent=8 // pred_check_branch
          %32 = sbr.rel target = $region35
        $region34: #{custom-call.77} parent=8 // pred_region
          _
        $region35: #{custom-call.77} parent=8 // pred_fallthru
          _
      $region9: #{custom-call.77} parent=4 // pred_fallthru
        _
      // Predicated region
      $region10: #{custom-call.77} parent=4 // pred_check
        _
      $region11: #{custom-call.77} parent=4 // pred_check_branch
        %7 = sbr.rel target = $region13
      $region12: #{custom-call.77} parent=4 // pred_region
        loop: start=0, step=1, limit=1
        $region14: #{custom-call.77} parent=12 // loop_pre_header
          _
        $region15: #{custom-call.77} parent=12 // loop_header
          %s10 = sphi 0, %s14
          %p11 = scmp.ge.s32.totalorder %s10, 1
          %s15 = sphi %s0, %s0
          %s16 = sphi [#allocation0], [#allocation0]
        $region16: #{custom-call.77} parent=12 // loop_header_branch
          %13 = sbr.rel (%p11) target = $region20
        $region17: #{custom-call.77} parent=12 // loop_body
          %v17 = vld [vmem:[%s15] sm:$0xff]
          %18 = vst [vmem:[%s16] sm:$0xff] %v17
        $region18: #{custom-call.77} parent=12 // loop_footer
          %s14 = sadd.s32 1, %s10
        $region19: #{custom-call.77} parent=12 // loop_footer_branch
          %9 = sbr.rel target = $region15
        $region20: #{custom-call.77} parent=12 // loop_exit
          _
      $region13: #{custom-call.77} parent=4 // pred_fallthru
        _
    $region5: #{custom-call.77} parent=1 // pred_fallthru
      _
    %33 = vnop
    %v34 = vlaneseq
    %v35 = vand.u32 %v34, 127
    %vm36 = vcmp.lt.s32.totalorder %v35, 8
    %v37 = vlaneseq
    %v38 = vshrl.u32 %v37, 7
    %vm40 = vcmp.eq.s32.totalorder %v38, %v35
    %v41 = vld [vmem:[#allocation0] sm:$0xff]
    %v42 = vsel %vm40, %v41, 0.0
    %43 = vadd.xlane.f32.xlu0 %v42
    %v44 = vpop.xlane.xlu0 %43
    %vm45 = vcmp.ge.s32.totalorder %v38, %v35
    %vm46 = vmand %vm45, %vm36
    %v47 = vsel %vm46, %v41, 0.0
    %v48 = vrcp.pop %v44
    %v49 = vmul.f32 %v47, %v48
    %50 = vst [vmem:[#allocation2] sm:$0xff] %v49
    %v51 = vlaneseq
    %v52 = vand.u32 %v51, 127
    %v53 = vlaneseq
    %v54 = vshrl.u32 %v53, 7
    %vm56 = vcmp.eq.s32.totalorder %v52, %v54
    %v57 = vlaneseq
    %v58 = vand.u32 %v57, 127
    %vm59 = vcmp.eq.s32.totalorder %v58, 0
    %v60 = vsel %vm59, 1.0, -1.0
    %v61 = vsel %vm56, %v60, 0.0
    %s62 = scalar_lea.vmem [#allocation2], 1
    %v63 = vld [vmem:[%s62] ss:$0 sm:$0xff]
    %v64 = vxor.u32 %v63, 2147483648
    %v65 = vlaneseq
    %v66 = vand.u32 %v65, 127
    %vm67 = vcmp.eq.s32.totalorder %v66, 1
    %v68 = vmul.f32 %v64, %v61
    %69 = vadd.xlane.f32.xlu0 %v68
    %v70 = vpop.xlane.xlu0 %69
    %v71 = vsel %vm67, %v70, %v61
    %s72 = scalar_lea.vmem [#allocation2], 2
    %v73 = vld [vmem:[%s72] ss:$0 sm:$0xff]
    %v74 = vxor.u32 %v73, 2147483648
    %v75 = vlaneseq
    %v76 = vand.u32 %v75, 127
    %vm77 = vcmp.eq.s32.totalorder %v76, 2
    %v78 = vmul.f32 %v74, %v71
    %79 = vadd.xlane.f32.xlu0 %v78
    %v80 = vpop.xlane.xlu0 %79
    %v81 = vsel %vm77, %v80, %v71
    %s82 = scalar_lea.vmem [#allocation2], 3
    %v83 = vld [vmem:[%s82] ss:$0 sm:$0xff]
    %v84 = vxor.u32 %v83, 2147483648
    %v85 = vlaneseq
    %v86 = vand.u32 %v85, 127
    %vm87 = vcmp.eq.s32.totalorder %v86, 3
    %v88 = vmul.f32 %v84, %v81
    %89 = vadd.xlane.f32.xlu0 %v88
    %v90 = vpop.xlane.xlu0 %89
    %v91 = vsel %vm87, %v90, %v81
    %s92 = scalar_lea.vmem [#allocation2], 4
    %v93 = vld [vmem:[%s92] ss:$0 sm:$0xff]
    %v94 = vxor.u32 %v93, 2147483648
    %v95 = vlaneseq
    %v96 = vand.u32 %v95, 127
    %vm97 = vcmp.eq.s32.totalorder %v96, 4
    %v98 = vmul.f32 %v94, %v91
    %99 = vadd.xlane.f32.xlu0 %v98
    %v100 = vpop.xlane.xlu0 %99
    %v101 = vsel %vm97, %v100, %v91
    %s102 = scalar_lea.vmem [#allocation2], 5
    %v103 = vld [vmem:[%s102] ss:$0 sm:$0xff]
    %v104 = vxor.u32 %v103, 2147483648
    %v105 = vlaneseq
    %v106 = vand.u32 %v105, 127
    %vm107 = vcmp.eq.s32.totalorder %v106, 5
    %v108 = vmul.f32 %v104, %v101
    %109 = vadd.xlane.f32.xlu0 %v108
    %v110 = vpop.xlane.xlu0 %109
    %v111 = vsel %vm107, %v110, %v101
    %s112 = scalar_lea.vmem [#allocation2], 6
    %v113 = vld [vmem:[%s112] ss:$0 sm:$0xff]
    %v114 = vxor.u32 %v113, 2147483648
    %v115 = vlaneseq
    %v116 = vand.u32 %v115, 127
    %vm117 = vcmp.eq.s32.totalorder %v116, 6
    %v118 = vmul.f32 %v114, %v111
    %119 = vadd.xlane.f32.xlu0 %v118
    %v120 = vpop.xlane.xlu0 %119
    %v121 = vsel %vm117, %v120, %v111
    %s122 = scalar_lea.vmem [#allocation2], 7
    %v123 = vld [vmem:[%s122] ss:$0 sm:$0xff]
    %v124 = vxor.u32 %v123, 2147483648
    %v125 = vlaneseq
    %v126 = vand.u32 %v125, 127
    %vm127 = vcmp.eq.s32.totalorder %v126, 7
    %v128 = vmul.f32 %v124, %v121
    %129 = vadd.xlane.f32.xlu0 %v128
    %v130 = vpop.xlane.xlu0 %129
    %v131 = vsel %vm127, %v130, %v121
    %v132 = vrcp.pop %v44
    %v133 = vmul.f32 %v131, %v132
    %vm134 = vweird.f32 %v44
    %v135 = vsel %vm134, %v131, %v133
    %136 = vst [vmem:[#allocation1] sm:$0xff] %v135
    // Predicated region
    $region36: #{custom-call.77} parent=1 // pred_check
      _
    $region37: #{custom-call.77} parent=1 // pred_check_branch
      %138 = sbr.rel (0) target = $region39
    $region38: #{custom-call.77} parent=1 // pred_region
      // Predicated region
      $region40: #{custom-call.77} parent=38 // pred_check
        _
      $region41: #{custom-call.77} parent=38 // pred_check_branch
        %140 = sbr.rel (0) target = $region43
      $region42: #{custom-call.77} parent=38 // pred_region
        // Predicated region
        $region55: #{custom-call.77} parent=42 // pred_check
          _
        $region56: #{custom-call.77} parent=42 // pred_check_branch
          %155 = sbr.rel (0) target = $region58
        $region57: #{custom-call.77} parent=42 // pred_region
          loop: start=0, step=1, limit=1
          $region59: #{custom-call.77} parent=57 // loop_pre_header
            _
          $region60: #{custom-call.77} parent=57 // loop_header
            %s157 = sphi 0, %s161
            %p158 = scmp.ge.s32.totalorder %s157, 1
            %s162 = sphi [#allocation1], [#allocation1]
            %s163 = sphi %s1, %s1
          $region61: #{custom-call.77} parent=57 // loop_header_branch
            %160 = sbr.rel (%p158) target = $region65
          $region62: #{custom-call.77} parent=57 // loop_body
            %v164 = vld [vmem:[%s162] sm:$0xff]
            %165 = vst [vmem:[%s163] sm:$0xff] %v164
          $region63: #{custom-call.77} parent=57 // loop_footer
            %s161 = sadd.s32 1, %s157
          $region64: #{custom-call.77} parent=57 // loop_footer_branch
            %156 = sbr.rel target = $region60
          $region65: #{custom-call.77} parent=57 // loop_exit
            _
        $region58: #{custom-call.77} parent=42 // pred_fallthru
          _
        // Predicated region
        $region66: #{custom-call.77} parent=42 // pred_check
          _
        $region67: #{custom-call.77} parent=42 // pred_check_branch
          %167 = sbr.rel target = $region69
        $region68: #{custom-call.77} parent=42 // pred_region
          _
        $region69: #{custom-call.77} parent=42 // pred_fallthru
          _
      $region43: #{custom-call.77} parent=38 // pred_fallthru
        _
      // Predicated region
      $region44: #{custom-call.77} parent=38 // pred_check
        _
      $region45: #{custom-call.77} parent=38 // pred_check_branch
        %142 = sbr.rel target = $region47
      $region46: #{custom-call.77} parent=38 // pred_region
        loop: start=0, step=1, limit=1
        $region48: #{custom-call.77} parent=46 // loop_pre_header
          _
        $region49: #{custom-call.77} parent=46 // loop_header
          %s145 = sphi 0, %s149
          %p146 = scmp.ge.s32.totalorder %s145, 1
          %s150 = sphi [#allocation1], [#allocation1]
          %s151 = sphi %s1, %s1
        $region50: #{custom-call.77} parent=46 // loop_header_branch
          %148 = sbr.rel (%p146) target = $region54
        $region51: #{custom-call.77} parent=46 // loop_body
          %v152 = vld [vmem:[%s150] sm:$0xff]
          %153 = vst [vmem:[%s151] sm:$0xff] %v152
        $region52: #{custom-call.77} parent=46 // loop_footer
          %s149 = sadd.s32 1, %s145
        $region53: #{custom-call.77} parent=46 // loop_footer_branch
          %144 = sbr.rel target = $region49
        $region54: #{custom-call.77} parent=46 // loop_exit
          _
      $region47: #{custom-call.77} parent=38 // pred_fallthru
        _
    $region39: #{custom-call.77} parent=1 // pred_fallthru
      _
    %168 = vnop

// kernel: dmegp_forward.3
$region0: #{dmegp_forward.3}
  #allocation0 [shape = 'u32[]', space=smem, size = 0x4, offset = 0x4, fixed_abs, tag = 'smem constant byte address 0x4 - core index']
  #allocation1 [shape = 'u32[144,128]{1,0:T(1,128)}', space=vmem, size = 0x12000, scoped, tag = 'internal scratch']
  %s0 = inlined_call_operand.vmem [shape: f32[8,128], index: 0, kind: input, shape index: {}]
  %s1 = inlined_call_operand.vmem [shape: f32[1,8], index: 1, kind: input, shape index: {}]
  %s2 = inlined_call_operand.vmem [shape: f32[8,128], index: 2, kind: input, shape index: {}]
  %s3 = inlined_call_operand.vmem [shape: f32[2], index: 3, kind: input, shape index: {}]
  %s4 = inlined_call_operand.vmem [shape: f32[1,128], index: 4, kind: output, shape index: {0}]
  %s5 = inlined_call_operand.vmem [shape: f32[1,128], index: 5, kind: output, shape index: {1}]
  %6 = xla_tuple %s4, %s5
  %s7 = sld [smem:[#allocation0]]
  $region46: #{dmegp_forward.3} parent=0
    _
  %s9 = ssub.s32 1, %s7
  %s10 = scalar_select 0, %s9, %s7
  $region1: #{dmegp_forward.3} parent=0
    #allocation2 [shape = 'u8[512]{0}', space=smem, size = 0x200, scoped, tag = 'input window, operand 3, single buffered']
    #allocation3 [shape = 's32[1]{0}', space=sflag, size = 0x4, scoped, tag = 'scoped memory for dmegp_forward.3']
    %11 = vsyncpa [#allocation3], 0
    // Predicated region
    $region2: #{dmegp_forward.3} parent=1 // pred_check
      _
    $region3: #{dmegp_forward.3} parent=1 // pred_check_branch
      %13 = sbr.rel (0) target = $region5
    $region4: #{dmegp_forward.3} parent=1 // pred_region
      _
    $region5: #{dmegp_forward.3} parent=1 // pred_fallthru
      _
    // Predicated region
    $region6: #{dmegp_forward.3} parent=1 // pred_check
      _
    $region7: #{dmegp_forward.3} parent=1 // pred_check_branch
      %15 = sbr.rel (0) target = $region9
    $region8: #{dmegp_forward.3} parent=1 // pred_region
      _
    $region9: #{dmegp_forward.3} parent=1 // pred_fallthru
      _
    // Predicated region
    $region10: #{dmegp_forward.3} parent=1 // pred_check
      _
    $region11: #{dmegp_forward.3} parent=1 // pred_check_branch
      %17 = sbr.rel (0) target = $region13
    $region12: #{dmegp_forward.3} parent=1 // pred_region
      _
    $region13: #{dmegp_forward.3} parent=1 // pred_fallthru
      _
    // Predicated region
    $region14: #{dmegp_forward.3} parent=1 // pred_check
      _
    $region15: #{dmegp_forward.3} parent=1 // pred_check_branch
      %19 = sbr.rel (0) target = $region17
    $region16: #{dmegp_forward.3} parent=1 // pred_region
      %s21 = ssub.s32 16, 16
      %22 = vsyncadd [#allocation3], %s21
      %s24 = sshll.u32 %s3, 4
      %s25 = int_to_ptr.vmem [resolvable:$true] %s24
      %27 = dma.vmem_to_smem %s25, 16, [#allocation2], [#allocation3]
    $region17: #{dmegp_forward.3} parent=1 // pred_fallthru
      _
    // Predicated region
    $region18: #{dmegp_forward.3} parent=1 // pred_check
      _
    $region19: #{dmegp_forward.3} parent=1 // pred_check_branch
      %29 = sbr.rel (0) target = $region21
    $region20: #{dmegp_forward.3} parent=1 // pred_region
      %30 = dma.done [#allocation3], 16
    $region21: #{dmegp_forward.3} parent=1 // pred_fallthru
      _
    %31 = sfence
    %p32 = scmp.eq.s32.totalorder 0, 0
    // Predicated region
    $region22: #{dmegp_forward.3} parent=1 // pred_check
      %p33 = pneg %p32
    $region23: #{dmegp_forward.3} parent=1 // pred_check_branch
      %35 = sbr.rel (%p33) target = $region25
    $region24: #{dmegp_forward.3} parent=1 // pred_region
      %36 = vst [vmem:[%s4] sm:$0x1] 0.0
      %37 = vst [vmem:[%s5] sm:$0x1] 0.0
    $region25: #{dmegp_forward.3} parent=1 // pred_fallthru
      _
    %v38 = vld [vmem:[%s0] sm:$0xff]
    %v39 = vld [vmem:[%s2] sm:$0xff]
    %v40 = vld [vmem:[%s4] sm:$0x1]
    %v41 = vld [vmem:[%s1] sm:$0x1]
    %vm42 = vcmask 64512
    %v44 = vsel %vm42, %v41, 0
    %46 = vmatprep.subr.mxu0 0.0
    %47 = vmatpush1.msra.mxu0 %v38
    %48 = vmatprep.subr.mxu0 0.0
    %49 = vmatpush1.msra.mxu0 0.0
    %50 = vmatprep.subr.mxu0 0.0
    %51 = vmatpush1.msra.mxu0 0.0
    %52 = vmatprep.subr.mxu0 0.0
    %53 = vmatpush1.msra.mxu0 0.0
    %54 = vmatprep.subr.mxu0 0.0
    %55 = vmatpush1.msra.mxu0 0.0
    %56 = vmatprep.subr.mxu0 0.0
    %57 = vmatpush1.msra.mxu0 0.0
    %58 = vmatprep.subr.mxu0 0.0
    %59 = vmatpush1.msra.mxu0 0.0
    %60 = vmatprep.subr.mxu0 0.0
    %61 = vmatpush1.msra.mxu0 0.0
    %62 = vmatprep.subr.mxu0 0.0
    %63 = vmatpush1.msra.mxu0 0.0
    %64 = vmatprep.subr.mxu0 0.0
    %65 = vmatpush1.msra.mxu0 0.0
    %66 = vmatprep.subr.mxu0 0.0
    %67 = vmatpush1.msra.mxu0 0.0
    %68 = vmatprep.subr.mxu0 0.0
    %69 = vmatpush1.msra.mxu0 0.0
    %70 = vmatprep.subr.mxu0 0.0
    %71 = vmatpush1.msra.mxu0 0.0
    %72 = vmatprep.subr.mxu0 0.0
    %73 = vmatpush1.msra.mxu0 0.0
    %74 = vmatprep.subr.mxu0 0.0
    %75 = vmatpush1.msra.mxu0 0.0
    %76 = vmatprep.subr.mxu0 0.0
    %77 = vmatpush1.msra.mxu0 0.0
    %78 = vmatprep.subr.mxu0 0.0
    %79 = vmatpush1.msra.mxu0 0.0
    %80 = vmatprep.subr.mxu0 0.0
    %81 = vmatpush1.msra.mxu0 0.0
    %82 = vmatprep.subr.mxu0 0.0
    %83 = vmatpush1.msra.mxu0 0.0
    %84 = vmatprep.subr.mxu0 0.0
    %85 = vmatpush1.msra.mxu0 0.0
    %86 = vmatprep.subr.mxu0 0.0
    %87 = vmatpush1.msra.mxu0 0.0
    %88 = vmatprep.subr.mxu0 0.0
    %89 = vmatpush1.msra.mxu0 0.0
    %90 = vmatprep.subr.mxu0 0.0
    %91 = vmatpush1.msra.mxu0 0.0
    %92 = vmatprep.subr.mxu0 0.0
    %93 = vmatpush1.msra.mxu0 0.0
    %94 = vmatprep.subr.mxu0 0.0
    %95 = vmatpush1.msra.mxu0 0.0
    %96 = vmatprep.subr.mxu0 0.0
    %97 = vmatpush1.msra.mxu0 0.0
    %98 = vmatprep.subr.mxu0 0.0
    %99 = vmatpush1.msra.mxu0 0.0
    %100 = vmatprep.subr.mxu0 0.0
    %101 = vmatpush1.msra.mxu0 0.0
    %102 = vmatprep.subr.mxu0 0.0
    %103 = vmatpush1.msra.mxu0 0.0
    %104 = vmatprep.subr.mxu0 0.0
    %105 = vmatpush1.msra.mxu0 0.0
    %106 = vmatprep.subr.mxu0 0.0
    %107 = vmatpush1.msra.mxu0 0.0
    %108 = vmatprep.subr.mxu0 0.0
    %109 = vmatpush1.msra.mxu0 0.0
    %110 = vmatprep.mubr.f32.mxu0 0.0
    %111 = vmatmul.mubr.f32.gmra.mrb[0].mxu0 %v44
    %v112 = vpop.f32.mrb[0].mxu0
    %v113 = vadd.f32 0.0, %v112
    %v114 = vpop.f32.mrb[0].mxu0
    %115 = vdwg.mxu0
    %v116 = vadd.f32 %v40, %v113
    %117 = vst [vmem:[%s4] sm:$0x1] %v116
    %v118 = vld [vmem:[%s5] sm:$0x1]
    %v119 = vmul.f32 %v39, %v39
    %v121 = vsel %vm42, 1.0, 0
    %123 = vmatprep.subr.mxu0 0.0
    %124 = vmatpush1.msra.mxu0 %v119
    %125 = vmatprep.subr.mxu0 0.0
    %126 = vmatpush1.msra.mxu0 0.0
    %127 = vmatprep.subr.mxu0 0.0
    %128 = vmatpush1.msra.mxu0 0.0
    %129 = vmatprep.subr.mxu0 0.0
    %130 = vmatpush1.msra.mxu0 0.0
    %131 = vmatprep.subr.mxu0 0.0
    %132 = vmatpush1.msra.mxu0 0.0
    %133 = vmatprep.subr.mxu0 0.0
    %134 = vmatpush1.msra.mxu0 0.0
    %135 = vmatprep.subr.mxu0 0.0
    %136 = vmatpush1.msra.mxu0 0.0
    %137 = vmatprep.subr.mxu0 0.0
    %138 = vmatpush1.msra.mxu0 0.0
    %139 = vmatprep.subr.mxu0 0.0
    %140 = vmatpush1.msra.mxu0 0.0
    %141 = vmatprep.subr.mxu0 0.0
    %142 = vmatpush1.msra.mxu0 0.0
    %143 = vmatprep.subr.mxu0 0.0
    %144 = vmatpush1.msra.mxu0 0.0
    %145 = vmatprep.subr.mxu0 0.0
    %146 = vmatpush1.msra.mxu0 0.0
    %147 = vmatprep.subr.mxu0 0.0
    %148 = vmatpush1.msra.mxu0 0.0
    %149 = vmatprep.subr.mxu0 0.0
    %150 = vmatpush1.msra.mxu0 0.0
    %151 = vmatprep.subr.mxu0 0.0
    %152 = vmatpush1.msra.mxu0 0.0
    %153 = vmatprep.subr.mxu0 0.0
    %154 = vmatpush1.msra.mxu0 0.0
    %155 = vmatprep.subr.mxu0 0.0
    %156 = vmatpush1.msra.mxu0 0.0
    %157 = vmatprep.subr.mxu0 0.0
    %158 = vmatpush1.msra.mxu0 0.0
    %159 = vmatprep.subr.mxu0 0.0
    %160 = vmatpush1.msra.mxu0 0.0
    %161 = vmatprep.subr.mxu0 0.0
    %162 = vmatpush1.msra.mxu0 0.0
    %163 = vmatprep.subr.mxu0 0.0
    %164 = vmatpush1.msra.mxu0 0.0
    %165 = vmatprep.subr.mxu0 0.0
    %166 = vmatpush1.msra.mxu0 0.0
    %167 = vmatprep.subr.mxu0 0.0
    %168 = vmatpush1.msra.mxu0 0.0
    %169 = vmatprep.subr.mxu0 0.0
    %170 = vmatpush1.msra.mxu0 0.0
    %171 = vmatprep.subr.mxu0 0.0
    %172 = vmatpush1.msra.mxu0 0.0
    %173 = vmatprep.subr.mxu0 0.0
    %174 = vmatpush1.msra.mxu0 0.0
    %175 = vmatprep.subr.mxu0 0.0
    %176 = vmatpush1.msra.mxu0 0.0
    %177 = vmatprep.subr.mxu0 0.0
    %178 = vmatpush1.msra.mxu0 0.0
    %179 = vmatprep.subr.mxu0 0.0
    %180 = vmatpush1.msra.mxu0 0.0
    %181 = vmatprep.subr.mxu0 0.0
    %182 = vmatpush1.msra.mxu0 0.0
    %183 = vmatprep.subr.mxu0 0.0
    %184 = vmatpush1.msra.mxu0 0.0
    %185 = vmatprep.subr.mxu0 0.0
    %186 = vmatpush1.msra.mxu0 0.0
    %187 = vmatprep.mubr.f32.mxu0 0.0
    %188 = vmatmul.mubr.f32.gmra.mrb[0].mxu0 %v121
    %v189 = vpop.f32.mrb[0].mxu0
    %v190 = vadd.f32 0.0, %v189
    %v191 = vpop.f32.mrb[0].mxu0
    %192 = vdwg.mxu0
    %v193 = vadd.f32 %v118, %v190
    %194 = vst [vmem:[%s5] sm:$0x1] %v193
    // Predicated region
    $region26: #{dmegp_forward.3} parent=1 // pred_check
      %p195 = pneg %p32
    $region27: #{dmegp_forward.3} parent=1 // pred_check_branch
      %197 = sbr.rel (%p195) target = $region29
    $region28: #{dmegp_forward.3} parent=1 // pred_region
      %s198 = sld [smem:[#allocation2]]
      %s199 = sld [smem:[#allocation2 + $0x1]]
      %v200 = vld [vmem:[%s5] sm:$0x1]
      %v201 = vstv %s198
      %v202 = vsub.f32 %v201, %v200
      %v203 = vmax.f32 %v202, 0.0
      %v204 = vstv %s199
      %v205 = vadd.f32 %v203, %v204
      %206 = vst [vmem:[%s5] sm:$0x1] %v205
    $region29: #{dmegp_forward.3} parent=1 // pred_fallthru
      _
    // Predicated region
    $region30: #{dmegp_forward.3} parent=1 // pred_check
      _
    $region31: #{dmegp_forward.3} parent=1 // pred_check_branch
      %208 = sbr.rel (0) target = $region33
    $region32: #{dmegp_forward.3} parent=1 // pred_region
      _
    $region33: #{dmegp_forward.3} parent=1 // pred_fallthru
      _
    // Predicated region
    $region34: #{dmegp_forward.3} parent=1 // pred_check
      _
    $region35: #{dmegp_forward.3} parent=1 // pred_check_branch
      %210 = sbr.rel (0) target = $region37
    $region36: #{dmegp_forward.3} parent=1 // pred_region
      _
    $region37: #{dmegp_forward.3} parent=1 // pred_fallthru
      _
    // Predicated region
    $region38: #{dmegp_forward.3} parent=1 // pred_check
      _
    $region39: #{dmegp_forward.3} parent=1 // pred_check_branch
      %212 = sbr.rel (0) target = $region41
    $region40: #{dmegp_forward.3} parent=1 // pred_region
      _
    $region41: #{dmegp_forward.3} parent=1 // pred_fallthru
      _
    // Predicated region
    $region42: #{dmegp_forward.3} parent=1 // pred_check
      _
    $region43: #{dmegp_forward.3} parent=1 // pred_check_branch
      %214 = sbr.rel (0) target = $region45
    $region44: #{dmegp_forward.3} parent=1 // pred_region
      _
    $region45: #{dmegp_forward.3} parent=1 // pred_fallthru
      _
    %215 = vsyncpa [#allocation3], 1

// kernel: dmegp_forward.2
$region0: #{dmegp_forward.2}
  #allocation0 [shape = 'u32[]', space=smem, size = 0x4, offset = 0x4, fixed_abs, tag = 'smem constant byte address 0x4 - core index']
  #allocation1 [shape = 'u32[144,128]{1,0:T(1,128)}', space=vmem, size = 0x12000, scoped, tag = 'internal scratch']
  #allocation2 [shape = 'f32[1]{0:T(128)S(6)}', space=smem, size = 0x200, scoped, tag = 'scoped memory for dmegp_forward.2']
  %s0 = inlined_call_operand.vmem [shape: f32[8,4], index: 0, kind: input, shape index: {}]
  %s1 = inlined_call_operand.vmem [shape: f32[4,128], index: 1, kind: input, shape index: {}]
  %s2 = inlined_call_operand.vmem [shape: f32[8,1], index: 2, kind: input, shape index: {}]
  %s3 = inlined_call_operand.vmem [shape: f32[1,128], index: 3, kind: input, shape index: {}]
  %s4 = inlined_call_operand.<no memory space> [shape: f32[1], index: 4, kind: input, shape index: {}]
  %s5 = inlined_call_operand.vmem [shape: f32[8,128], index: 5, kind: output, shape index: {}]
  %s6 = sld [smem:[#allocation0]]
  $region30: #{dmegp_forward.2} parent=0
    _
  %s8 = ssub.s32 1, %s6
  %s9 = scalar_select 0, %s8, %s6
  %10 = sst [smem:[#allocation2]] %s4
  // Predicated region
  $region2: #{dmegp_forward.2} parent=0 // pred_check
    _
  $region3: #{dmegp_forward.2} parent=0 // pred_check_branch
    %12 = sbr.rel (0) target = $region5
  $region4: #{dmegp_forward.2} parent=0 // pred_region
    _
  $region5: #{dmegp_forward.2} parent=0 // pred_fallthru
    _
  // Predicated region
  $region6: #{dmegp_forward.2} parent=0 // pred_check
    _
  $region7: #{dmegp_forward.2} parent=0 // pred_check_branch
    %14 = sbr.rel (0) target = $region9
  $region8: #{dmegp_forward.2} parent=0 // pred_region
    _
  $region9: #{dmegp_forward.2} parent=0 // pred_fallthru
    _
  // Predicated region
  $region10: #{dmegp_forward.2} parent=0 // pred_check
    _
  $region11: #{dmegp_forward.2} parent=0 // pred_check_branch
    %16 = sbr.rel (0) target = $region13
  $region12: #{dmegp_forward.2} parent=0 // pred_region
    _
  $region13: #{dmegp_forward.2} parent=0 // pred_fallthru
    _
  // Predicated region
  $region14: #{dmegp_forward.2} parent=0 // pred_check
    _
  $region15: #{dmegp_forward.2} parent=0 // pred_check_branch
    %18 = sbr.rel (0) target = $region17
  $region16: #{dmegp_forward.2} parent=0 // pred_region
    _
  $region17: #{dmegp_forward.2} parent=0 // pred_fallthru
    _
  // Predicated region
  $region18: #{dmegp_forward.2} parent=0 // pred_check
    _
  $region19: #{dmegp_forward.2} parent=0 // pred_check_branch
    %20 = sbr.rel (0) target = $region21
  $region20: #{dmegp_forward.2} parent=0 // pred_region
    _
  $region21: #{dmegp_forward.2} parent=0 // pred_fallthru
    _
  %v21 = vld [vmem:[%s0] sm:$0xff]
  %v22 = vld [vmem:[%s1] sm:$0xf]
  %vm23 = vcmask 31744
  %v25 = vsel %vm23, %v21, 0
  %vm27 = vcmask 1043456
  %v29 = vsel %vm27, %v22, 0
  %31 = vmatprep.subr.mxu0 0.0
  %32 = vmatpush1.msra.mxu0 %v29
  %33 = vmatprep.subr.mxu0 0.0
  %34 = vmatpush1.msra.mxu0 0.0
  %35 = vmatprep.subr.mxu0 0.0
  %36 = vmatpush1.msra.mxu0 0.0
  %37 = vmatprep.subr.mxu0 0.0
  %38 = vmatpush1.msra.mxu0 0.0
  %39 = vmatprep.subr.mxu0 0.0
  %40 = vmatpush1.msra.mxu0 0.0
  %41 = vmatprep.subr.mxu0 0.0
  %42 = vmatpush1.msra.mxu0 0.0
  %43 = vmatprep.subr.mxu0 0.0
  %44 = vmatpush1.msra.mxu0 0.0
  %45 = vmatprep.subr.mxu0 0.0
  %46 = vmatpush1.msra.mxu0 0.0
  %47 = vmatprep.subr.mxu0 0.0
  %48 = vmatpush1.msra.mxu0 0.0
  %49 = vmatprep.subr.mxu0 0.0
  %50 = vmatpush1.msra.mxu0 0.0
  %51 = vmatprep.subr.mxu0 0.0
  %52 = vmatpush1.msra.mxu0 0.0
  %53 = vmatprep.subr.mxu0 0.0
  %54 = vmatpush1.msra.mxu0 0.0
  %55 = vmatprep.subr.mxu0 0.0
  %56 = vmatpush1.msra.mxu0 0.0
  %57 = vmatprep.subr.mxu0 0.0
  %58 = vmatpush1.msra.mxu0 0.0
  %59 = vmatprep.subr.mxu0 0.0
  %60 = vmatpush1.msra.mxu0 0.0
  %61 = vmatprep.subr.mxu0 0.0
  %62 = vmatpush1.msra.mxu0 0.0
  %63 = vmatprep.subr.mxu0 0.0
  %64 = vmatpush1.msra.mxu0 0.0
  %65 = vmatprep.subr.mxu0 0.0
  %66 = vmatpush1.msra.mxu0 0.0
  %67 = vmatprep.subr.mxu0 0.0
  %68 = vmatpush1.msra.mxu0 0.0
  %69 = vmatprep.subr.mxu0 0.0
  %70 = vmatpush1.msra.mxu0 0.0
  %71 = vmatprep.subr.mxu0 0.0
  %72 = vmatpush1.msra.mxu0 0.0
  %73 = vmatprep.subr.mxu0 0.0
  %74 = vmatpush1.msra.mxu0 0.0
  %75 = vmatprep.subr.mxu0 0.0
  %76 = vmatpush1.msra.mxu0 0.0
  %77 = vmatprep.subr.mxu0 0.0
  %78 = vmatpush1.msra.mxu0 0.0
  %79 = vmatprep.subr.mxu0 0.0
  %80 = vmatpush1.msra.mxu0 0.0
  %81 = vmatprep.subr.mxu0 0.0
  %82 = vmatpush1.msra.mxu0 0.0
  %83 = vmatprep.subr.mxu0 0.0
  %84 = vmatpush1.msra.mxu0 0.0
  %85 = vmatprep.subr.mxu0 0.0
  %86 = vmatpush1.msra.mxu0 0.0
  %87 = vmatprep.subr.mxu0 0.0
  %88 = vmatpush1.msra.mxu0 0.0
  %89 = vmatprep.subr.mxu0 0.0
  %90 = vmatpush1.msra.mxu0 0.0
  %91 = vmatprep.subr.mxu0 0.0
  %92 = vmatpush1.msra.mxu0 0.0
  %93 = vmatprep.subr.mxu0 0.0
  %94 = vmatpush1.msra.mxu0 0.0
  %95 = vmatprep.mubr.f32.mxu0 0.0
  %96 = vmatmul.mubr.f32.gmra.mrb[0].mxu0 %v25
  %v97 = vpop.f32.mrb[0].mxu0
  %v98 = vadd.f32 0.0, %v97
  %v99 = vpop.f32.mrb[0].mxu0
  %100 = vdwg.mxu0
  %v101 = vld [vmem:[%s2] sm:$0xff]
  %v102 = vld [vmem:[%s3] sm:$0x1]
  %104 = vset.pattern.permute.xlu0 0
  %105 = vperm.xlu0 %104, %v101
  %v106 = vpop.permute.xlu0 %105
  %v109 = vlaneseq
  %v110 = vshrl.u32 %v109, 7
  %v111 = vsub.s32 0, %v110
  %v112 = vrot.slane %v102, %v111
  %v114 = vadd.f32 %v106, %v112
  %v115 = vmul.f32 %v98, 2.0
  %v116 = vsub.f32 %v114, %v115
  %v117 = vmax.f32 %v116, 0.0
  %s118 = sld [smem:[#allocation2]]
  %v119 = vsub.f32 0.0, %v117
  %v120 = vmul.f32 %v119, 1.442695
  %v121 = vpow.pop %v120
  %v122 = vstv %s118
  %v123 = vmul.f32 %v122, %v121
  %124 = vst [vmem:[%s5] sm:$0xff] %v123
  // Predicated region
  $region22: #{dmegp_forward.2} parent=0 // pred_check
    _
  $region23: #{dmegp_forward.2} parent=0 // pred_check_branch
    %126 = sbr.rel (0) target = $region25
  $region24: #{dmegp_forward.2} parent=0 // pred_region
    _
  $region25: #{dmegp_forward.2} parent=0 // pred_fallthru
    _
  // Predicated region
  $region26: #{dmegp_forward.2} parent=0 // pred_check
    _
  $region27: #{dmegp_forward.2} parent=0 // pred_check_branch
    %128 = sbr.rel (0) target = $region29
  $region28: #{dmegp_forward.2} parent=0 // pred_region
    _
  $region29: #{dmegp_forward.2} parent=0 // pred_fallthru
    _

</llo_original>
